<compile_context>
chip_gen: v5e
topology: v5e:2x2
jax: 0.10.0
libtpu: 0.0.40
codegen_flags: <defaults>
</compile_context>

<pallas_src>
import jax
import jax.numpy as jnp
from jax.experimental import pallas as pl
from jax.experimental.pallas import tpu as pltpu

_LANE = 128
_VMEM_BUDGET = 24 * 1024 * 1024  # stay comfortably inside default scoped VMEM


def _round_up(n, m):
    return (n + m - 1) // m * m


def _make_mlp_kernel(h1p, h2p, h3p):
    def mlp_kernel(x_ref, w1_ref, w2_ref, w3_ref, b_ref, o_ref):
        x = x_ref[...]                       # compute dtype (bf16) batch tile
        b1 = b_ref[0:1, 0:h1p]               # f32, static lane-aligned slices
        b2 = b_ref[1:2, 0:h2p]
        b3 = b_ref[2:3, 0:h3p]
        # bf16 operands on the MXU, f32 accumulation; elementwise math in f32.
        h1 = jnp.tanh(jnp.dot(x, w1_ref[...],
                              preferred_element_type=jnp.float32) + b1)
        h2 = jnp.tanh(jnp.dot(h1.astype(w2_ref.dtype), w2_ref[...],
                              preferred_element_type=jnp.float32) + b2)
        h3 = jnp.tanh(jnp.dot(h2.astype(w3_ref.dtype), w3_ref[...],
                              preferred_element_type=jnp.float32) + b3)
        o_ref[...] = h3.astype(o_ref.dtype)
    return mlp_kernel


def _vmem_estimate(block_b, d0p, h1p, h2p, h3p, act_bytes, w_bytes):
    weights = (d0p * h1p + h1p * h2p + h2p * h3p) * w_bytes * 2  # double-buffered (conservative)
    biases = 3 * max(h1p, h2p, h3p) * 4 * 2
    x_tiles = 2 * block_b * d0p * act_bytes
    o_tiles = 2 * block_b * h3p * 4
    interm = block_b * (h1p + h2p + h3p) * 4
    return weights + biases + x_tiles + o_tiles + interm


def mlp_forward(x, w1, b1, w2, b2, w3, b3, *, block_b=None,
                compute_dtype=jnp.bfloat16):
    """x: (B, input_dim); w_i: (in, out) [transposed vs torch]; b_i: (out,).

    Returns (B, hid3) in x.dtype. Matmuls run in `compute_dtype` on the MXU
    with f32 accumulation; bias-add / tanh are f32.
    """
    B, d0 = x.shape
    h1, h2, h3 = w1.shape[1], w2.shape[1], w3.shape[1]

    # --- lane-pad all feature dims to multiples of 128 -----------------------
    d0p = _round_up(d0, _LANE)
    h1p = _round_up(h1, _LANE)
    h2p = _round_up(h2, _LANE)
    h3p = _round_up(h3, _LANE)
    dmax = max(h1p, h2p, h3p)

    w_bytes = jnp.dtype(compute_dtype).itemsize
    act_bytes = w_bytes

    w1p = jnp.zeros((d0p, h1p), compute_dtype).at[:d0, :h1].set(w1.astype(compute_dtype))
    w2p = jnp.zeros((h1p, h2p), compute_dtype).at[:h1, :h2].set(w2.astype(compute_dtype))
    w3p = jnp.zeros((h2p, h3p), compute_dtype).at[:h2, :h3].set(w3.astype(compute_dtype))

    # Pack the three biases into one (3, dmax) f32 array -> single DMA stream.
    bpack = jnp.zeros((3, dmax), jnp.float32)
    bpack = bpack.at[0, :h1].set(b1.reshape(-1).astype(jnp.float32))
    bpack = bpack.at[1, :h2].set(b2.reshape(-1).astype(jnp.float32))
    bpack = bpack.at[2, :h3].set(b3.reshape(-1).astype(jnp.float32))

    # --- batch tiling --------------------------------------------------------
    row_mult = 16 if w_bytes == 2 else 8
    if block_b is None:
        block_b = min(_round_up(B, row_mult), 512)
        while (block_b > row_mult and
               _vmem_estimate(block_b, d0p, h1p, h2p, h3p, act_bytes, w_bytes)
               > _VMEM_BUDGET):
            block_b = _round_up(block_b // 2, row_mult)
    block_b = _round_up(block_b, row_mult)

    Bp = _round_up(B, block_b)
    xp = jnp.zeros((Bp, d0p), compute_dtype).at[:B, :d0].set(x.astype(compute_dtype))

    grid = (Bp // block_b,)

    def batch_map(i):
        return (i, 0)

    def replicated(i):
        return (0, 0)

    cost = pl.CostEstimate(
        flops=2 * Bp * (d0p * h1p + h1p * h2p + h2p * h3p),
        transcendentals=Bp * (h1p + h2p + h3p),
        bytes_accessed=(xp.nbytes + w1p.nbytes + w2p.nbytes + w3p.nbytes
                        + bpack.nbytes + Bp * h3p * jnp.dtype(x.dtype).itemsize),
    )

    out_padded = pl.pallas_call(
        _make_mlp_kernel(h1p, h2p, h3p),
        out_shape=jax.ShapeDtypeStruct((Bp, h3p), x.dtype),
        grid_spec=pltpu.PrefetchScalarGridSpec(
            num_scalar_prefetch=0,
            grid=grid,
            in_specs=[
                pl.BlockSpec((block_b, d0p), batch_map),   # x tile
                pl.BlockSpec((d0p, h1p), replicated),      # W1 (resident)
                pl.BlockSpec((h1p, h2p), replicated),      # W2 (resident)
                pl.BlockSpec((h2p, h3p), replicated),      # W3 (resident)
                pl.BlockSpec((3, dmax), replicated),       # packed biases
            ],
            out_specs=pl.BlockSpec((block_b, h3p), batch_map),
        ),
        compiler_params=pltpu.CompilerParams(
            dimension_semantics=("parallel",),
        ),
        cost_estimate=cost,
    )(xp, w1p, w2p, w3p, bpack)

    return out_padded[:B, :h3]


def mlp_reference(x, w1, b1, w2, b2, w3, b3, compute_dtype=jnp.bfloat16):
    """Plain-JAX reference in the same compute precision as the kernel."""
    def lin(a, w, b):
        return jnp.dot(a.astype(compute_dtype), w.astype(compute_dtype),
                       preferred_element_type=jnp.float32) + b.astype(jnp.float32)
    h1 = jnp.tanh(lin(x, w1, b1))
    h2 = jnp.tanh(lin(h1, w2, b2))
    h3 = jnp.tanh(lin(h2, w3, b3))
    return h3.astype(x.dtype)


def init_linear_params(key, in_dim, out_dim, dtype=jnp.float32):
    """Matches PyTorch nn.Linear default init: U(-1/sqrt(in), 1/sqrt(in)).
    Weight returned as (in_dim, out_dim) (transposed vs torch's (out, in))."""
    kw, kb = jax.random.split(key)
    bound = 1.0 / (in_dim ** 0.5)
    w = jax.random.uniform(kw, (in_dim, out_dim), dtype, minval=-bound, maxval=bound)
    b = jax.random.uniform(kb, (out_dim,), dtype, minval=-bound, maxval=bound)
    return w, b


if __name__ == "__main__":
    # Shapes consistent with the module: MLP(input_dim=32, 64, 64, 32), batch=8.
    input_dim, hid1, hid2, hid3 = 32, 64, 64, 32
    batch = 8

    key = jax.random.PRNGKey(0)
    kx, k1, k2, k3 = jax.random.split(key, 4)

    x = jax.random.normal(kx, (batch, input_dim), dtype=jnp.float32)
    w1, b1 = init_linear_params(k1, input_dim, hid1)
    w2, b2 = init_linear_params(k2, hid1, hid2)
    w3, b3 = init_linear_params(k3, hid2, hid3)

    out = mlp_forward(x, w1, b1, w2, b2, w3, b3)
    out = jax.block_until_ready(out)

    ref = jax.block_until_ready(mlp_reference(x, w1, b1, w2, b2, w3, b3))

    assert out.shape == (batch, hid3)
    assert jnp.allclose(out, ref, atol=2e-3, rtol=2e-3), (
        f"max abs err = {jnp.max(jnp.abs(out - ref))}")

    print("KERNEL_OK")
</pallas_src>

<mosaic_0001>
module attributes {stable_mosaic.version = 11 : i64} {
  func.func @mlp_kernel(%arg0: i32, %arg1: memref<16x128xbf16, #tpu.memory_space<vmem>>, %arg2: memref<128x128xbf16, #tpu.memory_space<vmem>>, %arg3: memref<128x128xbf16, #tpu.memory_space<vmem>>, %arg4: memref<128x128xbf16, #tpu.memory_space<vmem>>, %arg5: memref<3x128xf32, #tpu.memory_space<vmem>>, %arg6: memref<16x128xf32, #tpu.memory_space<vmem>>) attributes {dimension_semantics = [#tpu.dimension_semantics<parallel>], iteration_bounds = array<i64: 1>, scalar_prefetch = 0 : i64, scratch_operands = 0 : i64, tpu.core_type = #tpu.core_type<tc>, window_params = [{transform_indices = @transform_0, window_bounds = array<i64: 16, 128>}, {pipeline_mode = #tpu.pipeline_mode<synchronous>, transform_indices = @transform_1, window_bounds = array<i64: 128, 128>}, {pipeline_mode = #tpu.pipeline_mode<synchronous>, transform_indices = @transform_2, window_bounds = array<i64: 128, 128>}, {pipeline_mode = #tpu.pipeline_mode<synchronous>, transform_indices = @transform_3, window_bounds = array<i64: 128, 128>}, {pipeline_mode = #tpu.pipeline_mode<synchronous>, transform_indices = @transform_4, window_bounds = array<i64: 3, 128>}, {transform_indices = @transform_5, window_bounds = array<i64: 16, 128>}]} {
    %c0 = arith.constant 0 : index
    %c0_0 = arith.constant 0 : index
    %0 = vector.load %arg1[%c0, %c0_0] : memref<16x128xbf16, #tpu.memory_space<vmem>>, vector<16x128xbf16>
    %c0_1 = arith.constant 0 : index
    %c0_2 = arith.constant 0 : index
    %1 = vector.load %arg5[%c0_1, %c0_2] : memref<3x128xf32, #tpu.memory_space<vmem>>, vector<1x128xf32>
    %c1 = arith.constant 1 : index
    %c0_3 = arith.constant 0 : index
    %2 = vector.load %arg5[%c1, %c0_3] : memref<3x128xf32, #tpu.memory_space<vmem>>, vector<1x128xf32>
    %c2 = arith.constant 2 : index
    %c0_4 = arith.constant 0 : index
    %3 = vector.load %arg5[%c2, %c0_4] : memref<3x128xf32, #tpu.memory_space<vmem>>, vector<1x128xf32>
    %c0_5 = arith.constant 0 : index
    %c0_6 = arith.constant 0 : index
    %4 = vector.load %arg2[%c0_5, %c0_6] : memref<128x128xbf16, #tpu.memory_space<vmem>>, vector<128x128xbf16>
    %cst = arith.constant dense<0.000000e+00> : vector<16x128xf32>
    %5 = tpu.matmul %0, %4, %cst {dimension_numbers = #tpu.dot_dimension_numbers<[1], [0], [0], [1], [0, 0, 1, 1], [], []>} : vector<16x128xbf16>, vector<128x128xbf16>, vector<16x128xf32> -> vector<16x128xf32>
    %6 = vector.broadcast %1 : vector<1x128xf32> to vector<16x128xf32>
    %7 = arith.addf %5, %6 : vector<16x128xf32>
    %8 = math.tanh %7 : vector<16x128xf32>
    %9 = arith.truncf %8 : vector<16x128xf32> to vector<16x128xbf16>
    %c0_7 = arith.constant 0 : index
    %c0_8 = arith.constant 0 : index
    %10 = vector.load %arg3[%c0_7, %c0_8] : memref<128x128xbf16, #tpu.memory_space<vmem>>, vector<128x128xbf16>
    %cst_9 = arith.constant dense<0.000000e+00> : vector<16x128xf32>
    %11 = tpu.matmul %9, %10, %cst_9 {dimension_numbers = #tpu.dot_dimension_numbers<[1], [0], [0], [1], [0, 0, 1, 1], [], []>} : vector<16x128xbf16>, vector<128x128xbf16>, vector<16x128xf32> -> vector<16x128xf32>
    %12 = vector.broadcast %2 : vector<1x128xf32> to vector<16x128xf32>
    %13 = arith.addf %11, %12 : vector<16x128xf32>
    %14 = math.tanh %13 : vector<16x128xf32>
    %15 = arith.truncf %14 : vector<16x128xf32> to vector<16x128xbf16>
    %c0_10 = arith.constant 0 : index
    %c0_11 = arith.constant 0 : index
    %16 = vector.load %arg4[%c0_10, %c0_11] : memref<128x128xbf16, #tpu.memory_space<vmem>>, vector<128x128xbf16>
    %cst_12 = arith.constant dense<0.000000e+00> : vector<16x128xf32>
    %17 = tpu.matmul %15, %16, %cst_12 {dimension_numbers = #tpu.dot_dimension_numbers<[1], [0], [0], [1], [0, 0, 1, 1], [], []>} : vector<16x128xbf16>, vector<128x128xbf16>, vector<16x128xf32> -> vector<16x128xf32>
    %18 = vector.broadcast %3 : vector<1x128xf32> to vector<16x128xf32>
    %19 = arith.addf %17, %18 : vector<16x128xf32>
    %20 = math.tanh %19 : vector<16x128xf32>
    %c0_13 = arith.constant 0 : index
    %c0_14 = arith.constant 0 : index
    %21 = vector.load %arg6[%c0_13, %c0_14] : memref<16x128xf32, #tpu.memory_space<vmem>>, vector<16x128xf32>
    tpu.vector_store %arg6[%c0_13, %c0_14], %20 {strides = array<i32>} : memref<16x128xf32, #tpu.memory_space<vmem>>, vector<16x128xf32>,
    return
  }
  func.func @transform_0(%arg0: i32) -> (i32, i32) {
    %c0_i32 = arith.constant 0 : i32
    %c0_i32_0 = arith.constant 0 : i32
    return %arg0, %c0_i32 : i32, i32
  }
  func.func @transform_1(%arg0: i32) -> (i32, i32) {
    %c0_i32 = arith.constant 0 : i32
    %c0_i32_0 = arith.constant 0 : i32
    %c0_i32_1 = arith.constant 0 : i32
    return %c0_i32, %c0_i32_0 : i32, i32
  }
  func.func @transform_2(%arg0: i32) -> (i32, i32) {
    %c0_i32 = arith.constant 0 : i32
    %c0_i32_0 = arith.constant 0 : i32
    %c0_i32_1 = arith.constant 0 : i32
    return %c0_i32, %c0_i32_0 : i32, i32
  }
  func.func @transform_3(%arg0: i32) -> (i32, i32) {
    %c0_i32 = arith.constant 0 : i32
    %c0_i32_0 = arith.constant 0 : i32
    %c0_i32_1 = arith.constant 0 : i32
    return %c0_i32, %c0_i32_0 : i32, i32
  }
  func.func @transform_4(%arg0: i32) -> (i32, i32) {
    %c0_i32 = arith.constant 0 : i32
    %c0_i32_0 = arith.constant 0 : i32
    %c0_i32_1 = arith.constant 0 : i32
    return %c0_i32, %c0_i32_0 : i32, i32
  }
  func.func @transform_5(%arg0: i32) -> (i32, i32) {
    %c0_i32 = arith.constant 0 : i32
    %c0_i32_0 = arith.constant 0 : i32
    return %arg0, %c0_i32 : i32, i32
  }
}

</mosaic_0001>

<llo_original>
// kernel: tpu_custom_call.1
$region0: #{tpu_custom_call.1}
  #allocation0 [shape = 'u32[]', space=smem, size = 0x4, offset = 0x4, fixed_abs, tag = 'smem constant byte address 0x4 - core index']
  #allocation1 [shape = 'u32[72,128]{1,0:T(1,128)}', space=vmem, size = 0x9000, scoped, tag = 'internal scratch']
  %s0 = inlined_call_operand.hbm [shape: bf16[16,128], index: 0, kind: input, shape index: {}]
  %s1 = inlined_call_operand.hbm [shape: bf16[128,128], index: 1, kind: input, shape index: {}]
  %s2 = inlined_call_operand.hbm [shape: bf16[128,128], index: 2, kind: input, shape index: {}]
  %s3 = inlined_call_operand.hbm [shape: bf16[128,128], index: 3, kind: input, shape index: {}]
  %s4 = inlined_call_operand.hbm [shape: f32[3,128], index: 4, kind: input, shape index: {}]
  %s5 = inlined_call_operand.hbm [shape: f32[16,128], index: 5, kind: output, shape index: {}]
  %s6 = sld [smem:[#allocation0]]
  $region50: #{tpu_custom_call.1} parent=0
    _
  %s8 = ssub.s32 1, %s6
  %s9 = scalar_select 0, %s8, %s6
  $region1: #{tpu_custom_call.1} parent=0
    #allocation2 [shape = 'u8[4096]{0}', space=vmem, size = 0x1000, scoped, tag = 'input window, operand 0, single buffered']
    #allocation3 [shape = 's32[1]{0}', space=sflag, size = 0x4, scoped, tag = 'scoped memory for tpu_custom_call.1']
    #allocation4 [shape = 's32[1]{0}', space=sflag, size = 0x4, scoped, tag = 'scoped memory for tpu_custom_call.1']
    #allocation5 [shape = 'u8[32768]{0}', space=vmem, size = 0x8000, scoped, tag = 'input window, operand 1, single buffered']
    #allocation6 [shape = 's32[1]{0}', space=sflag, size = 0x4, scoped, tag = 'scoped memory for tpu_custom_call.1']
    #allocation7 [shape = 'u8[32768]{0}', space=vmem, size = 0x8000, scoped, tag = 'input window, operand 2, single buffered']
    #allocation8 [shape = 'u8[32768]{0}', space=vmem, size = 0x8000, scoped, tag = 'input window, operand 3, single buffered']
    #allocation9 [shape = 's32[1]{0}', space=sflag, size = 0x4, scoped, tag = 'scoped memory for tpu_custom_call.1']
    #allocation10 [shape = 'u8[2048]{0}', space=vmem, size = 0x800, scoped, tag = 'input window, operand 4, single buffered']
    #allocation11 [shape = 'u8[8192]{0}', space=vmem, size = 0x2000, scoped, tag = 'output window, operand 0, single buffered']
    %10 = vsyncpa [#allocation3], 0
    %11 = vsyncpa [#allocation6], 0
    %12 = vsyncpa [#allocation9], 0
    %13 = vsyncpa [#allocation4], 0
    // Predicated region
    $region2: #{tpu_custom_call.1} parent=1 // pred_check
      _
    $region3: #{tpu_custom_call.1} parent=1 // pred_check_branch
      %15 = sbr.rel (0) target = $region5
    $region4: #{tpu_custom_call.1} parent=1 // pred_region
      %17 = vsyncadd [#allocation3], 0
      %s18 = sshll.u32 %s0, 4
      %s19 = int_to_ptr.hbm [resolvable:$true] %s18
      %s20 = sshll.u32 [#allocation2], 4
      %s21 = int_to_ptr.vmem [resolvable:$true] %s20
      %26 = dma.hbm_to_vmem [thread:$0]  %s19, 128, %s21, [#allocation3], 64, 64, 4
    $region5: #{tpu_custom_call.1} parent=1 // pred_fallthru
      _
    // Predicated region
    $region6: #{tpu_custom_call.1} parent=1 // pred_check
      _
    $region7: #{tpu_custom_call.1} parent=1 // pred_check_branch
      %28 = sbr.rel (0) target = $region9
    $region8: #{tpu_custom_call.1} parent=1 // pred_region
      %30 = vsyncadd [#allocation6], 0
      %s31 = sshll.u32 %s1, 4
      %s32 = int_to_ptr.hbm [resolvable:$true] %s31
      %s33 = sshll.u32 [#allocation5], 4
      %s34 = int_to_ptr.vmem [resolvable:$true] %s33
      %39 = dma.hbm_to_vmem [thread:$0]  %s32, 1024, %s34, [#allocation6], 64, 64, 4
    $region9: #{tpu_custom_call.1} parent=1 // pred_fallthru
      _
    // Predicated region
    $region10: #{tpu_custom_call.1} parent=1 // pred_check
      _
    $region11: #{tpu_custom_call.1} parent=1 // pred_check_branch
      %41 = sbr.rel (0) target = $region13
    $region12: #{tpu_custom_call.1} parent=1 // pred_region
      %43 = vsyncadd [#allocation6], 0
      %s44 = sshll.u32 %s2, 4
      %s45 = int_to_ptr.hbm [resolvable:$true] %s44
      %s46 = sshll.u32 [#allocation7], 4
      %s47 = int_to_ptr.vmem [resolvable:$true] %s46
      %52 = dma.hbm_to_vmem [thread:$0]  %s45, 1024, %s47, [#allocation6], 64, 64, 4
    $region13: #{tpu_custom_call.1} parent=1 // pred_fallthru
      _
    // Predicated region
    $region14: #{tpu_custom_call.1} parent=1 // pred_check
      _
    $region15: #{tpu_custom_call.1} parent=1 // pred_check_branch
      %54 = sbr.rel (0) target = $region17
    $region16: #{tpu_custom_call.1} parent=1 // pred_region
      %56 = vsyncadd [#allocation9], 0
      %s57 = sshll.u32 %s3, 4
      %s58 = int_to_ptr.hbm [resolvable:$true] %s57
      %s59 = sshll.u32 [#allocation8], 4
      %s60 = int_to_ptr.vmem [resolvable:$true] %s59
      %65 = dma.hbm_to_vmem [thread:$0]  %s58, 1024, %s60, [#allocation9], 64, 64, 4
    $region17: #{tpu_custom_call.1} parent=1 // pred_fallthru
      _
    // Predicated region
    $region18: #{tpu_custom_call.1} parent=1 // pred_check
      _
    $region19: #{tpu_custom_call.1} parent=1 // pred_check_branch
      %67 = sbr.rel (0) target = $region21
    $region20: #{tpu_custom_call.1} parent=1 // pred_region
      %69 = vsyncadd [#allocation9], 0
      %s71 = sshll.u32 %s4, 4
      %s72 = int_to_ptr.hbm [resolvable:$true] %s71
      %s73 = sshll.u32 [#allocation10], 4
      %s74 = int_to_ptr.vmem [resolvable:$true] %s73
      %76 = dma.hbm_to_vmem [thread:$0]  %s72, 64, %s74, [#allocation9]
    $region21: #{tpu_custom_call.1} parent=1 // pred_fallthru
      _
    // Predicated region
    $region22: #{tpu_custom_call.1} parent=1 // pred_check
      _
    $region23: #{tpu_custom_call.1} parent=1 // pred_check_branch
      %78 = sbr.rel (0) target = $region25
    $region24: #{tpu_custom_call.1} parent=1 // pred_region
      %80 = dma.done [#allocation3], 128
    $region25: #{tpu_custom_call.1} parent=1 // pred_fallthru
      _
    // Predicated region
    $region26: #{tpu_custom_call.1} parent=1 // pred_check
      _
    $region27: #{tpu_custom_call.1} parent=1 // pred_check_branch
      %82 = sbr.rel (0) target = $region29
    $region28: #{tpu_custom_call.1} parent=1 // pred_region
      %84 = dma.done [#allocation6], 1024
    $region29: #{tpu_custom_call.1} parent=1 // pred_fallthru
      _
    // Predicated region
    $region30: #{tpu_custom_call.1} parent=1 // pred_check
      _
    $region31: #{tpu_custom_call.1} parent=1 // pred_check_branch
      %86 = sbr.rel (0) target = $region33
    $region32: #{tpu_custom_call.1} parent=1 // pred_region
      %88 = dma.done [#allocation6], 1024
    $region33: #{tpu_custom_call.1} parent=1 // pred_fallthru
      _
    // Predicated region
    $region34: #{tpu_custom_call.1} parent=1 // pred_check
      _
    $region35: #{tpu_custom_call.1} parent=1 // pred_check_branch
      %90 = sbr.rel (0) target = $region37
    $region36: #{tpu_custom_call.1} parent=1 // pred_region
      %92 = dma.done [#allocation9], 1024
    $region37: #{tpu_custom_call.1} parent=1 // pred_fallthru
      _
    // Predicated region
    $region38: #{tpu_custom_call.1} parent=1 // pred_check
      _
    $region39: #{tpu_custom_call.1} parent=1 // pred_check_branch
      %94 = sbr.rel (0) target = $region41
    $region40: #{tpu_custom_call.1} parent=1 // pred_region
      %96 = dma.done [#allocation9], 64
    $region41: #{tpu_custom_call.1} parent=1 // pred_fallthru
      _
    %v97 = vld [vmem:[#allocation2] sm:$0xf]
    %v98 = vld [vmem:[#allocation2 + $0x4] sm:$0xf]
    %v99 = vld [vmem:[#allocation10] sm:$0x1]
    %v100 = vld [vmem:[#allocation10 + $0x1] sm:$0x1]
    %v101 = vld [vmem:[#allocation10 + $0x2] sm:$0x1]
    %v102 = vld [vmem:[#allocation5] sm:$0xf]
    %v103 = vld [vmem:[#allocation5 + $0x4] sm:$0xf]
    %v104 = vld [vmem:[#allocation5 + $0x8] sm:$0xf]
    %v105 = vld [vmem:[#allocation5 + $0xc] sm:$0xf]
    %v106 = vld [vmem:[#allocation5 + $0x10] sm:$0xf]
    %v107 = vld [vmem:[#allocation5 + $0x14] sm:$0xf]
    %v108 = vld [vmem:[#allocation5 + $0x18] sm:$0xf]
    %v109 = vld [vmem:[#allocation5 + $0x1c] sm:$0xf]
    %v110 = vld [vmem:[#allocation5 + $0x20] sm:$0xf]
    %v111 = vld [vmem:[#allocation5 + $0x24] sm:$0xf]
    %v112 = vld [vmem:[#allocation5 + $0x28] sm:$0xf]
    %v113 = vld [vmem:[#allocation5 + $0x2c] sm:$0xf]
    %v114 = vld [vmem:[#allocation5 + $0x30] sm:$0xf]
    %v115 = vld [vmem:[#allocation5 + $0x34] sm:$0xf]
    %v116 = vld [vmem:[#allocation5 + $0x38] sm:$0xf]
    %v117 = vld [vmem:[#allocation5 + $0x3c] sm:$0xf]
    %v118 = vperm.slane %v99, 0
    %v121 = vunpack.c.l.b16 %v97
    %v122 = vunpack.c.l.b16 %v98
    %v123 = vpack.c.b16 %v122, %v121
    %v141 = vunpack.c.l.b16 %v102
    %v142 = vunpack.c.l.b16 %v103
    %v143 = vunpack.c.l.b16 %v104
    %v144 = vunpack.c.l.b16 %v105
    %v145 = vunpack.c.l.b16 %v106
    %v146 = vunpack.c.l.b16 %v107
    %v147 = vunpack.c.l.b16 %v108
    %v148 = vunpack.c.l.b16 %v109
    %v149 = vunpack.c.l.b16 %v110
    %v150 = vunpack.c.l.b16 %v111
    %v151 = vunpack.c.l.b16 %v112
    %v152 = vunpack.c.l.b16 %v113
    %v153 = vunpack.c.l.b16 %v114
    %v154 = vunpack.c.l.b16 %v115
    %v155 = vunpack.c.l.b16 %v116
    %v156 = vunpack.c.l.b16 %v117
    %v157 = vpack.c.b16 %v142, %v141
    %v158 = vpack.c.b16 %v144, %v143
    %v159 = vpack.c.b16 %v146, %v145
    %v160 = vpack.c.b16 %v148, %v147
    %v161 = vpack.c.b16 %v150, %v149
    %v162 = vpack.c.b16 %v152, %v151
    %v163 = vpack.c.b16 %v154, %v153
    %v164 = vpack.c.b16 %v156, %v155
    %173 = vmatpush.bf16.msra.mxu0 %v164
    %174 = vmatpush.bf16.msra.mxu0 %v163
    %175 = vmatpush.bf16.msra.mxu0 %v162
    %176 = vmatpush.bf16.msra.mxu0 %v161
    %177 = vmatpush.bf16.msra.mxu0 %v160
    %178 = vmatpush.bf16.msra.mxu0 %v159
    %179 = vmatpush.bf16.msra.mxu0 %v158
    %180 = vmatpush.bf16.msra.mxu0 %v157
    %181 = vmatmul.bf16.gmra.mxu0 %v123
    %v182 = vpop.f32.mrf.mxu0
    %v183 = vadd.f32 %v118, %v182
    %v184 = vpop.f32.mrf.mxu0
    %v185 = vadd.f32 %v118, %v184
    %186 = vdwg.mxu0
    %v187 = vtanh.pop %v183
    %v188 = vtanh.pop %v185
    %v189 = vpack.c.bf16 %v188, %v187
    %v190 = vld [vmem:[#allocation7] sm:$0xf]
    %v191 = vld [vmem:[#allocation7 + $0x4] sm:$0xf]
    %v192 = vld [vmem:[#allocation7 + $0x8] sm:$0xf]
    %v193 = vld [vmem:[#allocation7 + $0xc] sm:$0xf]
    %v194 = vld [vmem:[#allocation7 + $0x10] sm:$0xf]
    %v195 = vld [vmem:[#allocation7 + $0x14] sm:$0xf]
    %v196 = vld [vmem:[#allocation7 + $0x18] sm:$0xf]
    %v197 = vld [vmem:[#allocation7 + $0x1c] sm:$0xf]
    %v198 = vld [vmem:[#allocation7 + $0x20] sm:$0xf]
    %v199 = vld [vmem:[#allocation7 + $0x24] sm:$0xf]
    %v200 = vld [vmem:[#allocation7 + $0x28] sm:$0xf]
    %v201 = vld [vmem:[#allocation7 + $0x2c] sm:$0xf]
    %v202 = vld [vmem:[#allocation7 + $0x30] sm:$0xf]
    %v203 = vld [vmem:[#allocation7 + $0x34] sm:$0xf]
    %v204 = vld [vmem:[#allocation7 + $0x38] sm:$0xf]
    %v205 = vld [vmem:[#allocation7 + $0x3c] sm:$0xf]
    %v206 = vperm.slane %v100, 0
    %v223 = vunpack.c.l.b16 %v190
    %v224 = vunpack.c.l.b16 %v191
    %v225 = vunpack.c.l.b16 %v192
    %v226 = vunpack.c.l.b16 %v193
    %v227 = vunpack.c.l.b16 %v194
    %v228 = vunpack.c.l.b16 %v195
    %v229 = vunpack.c.l.b16 %v196
    %v230 = vunpack.c.l.b16 %v197
    %v231 = vunpack.c.l.b16 %v198
    %v232 = vunpack.c.l.b16 %v199
    %v233 = vunpack.c.l.b16 %v200
    %v234 = vunpack.c.l.b16 %v201
    %v235 = vunpack.c.l.b16 %v202
    %v236 = vunpack.c.l.b16 %v203
    %v237 = vunpack.c.l.b16 %v204
    %v238 = vunpack.c.l.b16 %v205
    %v239 = vpack.c.b16 %v224, %v223
    %v240 = vpack.c.b16 %v226, %v225
    %v241 = vpack.c.b16 %v228, %v227
    %v242 = vpack.c.b16 %v230, %v229
    %v243 = vpack.c.b16 %v232, %v231
    %v244 = vpack.c.b16 %v234, %v233
    %v245 = vpack.c.b16 %v236, %v235
    %v246 = vpack.c.b16 %v238, %v237
    %255 = vmatpush.bf16.msra.mxu0 %v246
    %256 = vmatpush.bf16.msra.mxu0 %v245
    %257 = vmatpush.bf16.msra.mxu0 %v244
    %258 = vmatpush.bf16.msra.mxu0 %v243
    %259 = vmatpush.bf16.msra.mxu0 %v242
    %260 = vmatpush.bf16.msra.mxu0 %v241
    %261 = vmatpush.bf16.msra.mxu0 %v240
    %262 = vmatpush.bf16.msra.mxu0 %v239
    %263 = vmatmul.bf16.gmra.mxu0 %v189
    %v264 = vpop.f32.mrf.mxu0
    %v265 = vadd.f32 %v206, %v264
    %v266 = vpop.f32.mrf.mxu0
    %v267 = vadd.f32 %v206, %v266
    %268 = vdwg.mxu0
    %v269 = vtanh.pop %v265
    %v270 = vtanh.pop %v267
    %v271 = vpack.c.bf16 %v270, %v269
    %v272 = vld [vmem:[#allocation8] sm:$0xf]
    %v273 = vld [vmem:[#allocation8 + $0x4] sm:$0xf]
    %v274 = vld [vmem:[#allocation8 + $0x8] sm:$0xf]
    %v275 = vld [vmem:[#allocation8 + $0xc] sm:$0xf]
    %v276 = vld [vmem:[#allocation8 + $0x10] sm:$0xf]
    %v277 = vld [vmem:[#allocation8 + $0x14] sm:$0xf]
    %v278 = vld [vmem:[#allocation8 + $0x18] sm:$0xf]
    %v279 = vld [vmem:[#allocation8 + $0x1c] sm:$0xf]
    %v280 = vld [vmem:[#allocation8 + $0x20] sm:$0xf]
    %v281 = vld [vmem:[#allocation8 + $0x24] sm:$0xf]
    %v282 = vld [vmem:[#allocation8 + $0x28] sm:$0xf]
    %v283 = vld [vmem:[#allocation8 + $0x2c] sm:$0xf]
    %v284 = vld [vmem:[#allocation8 + $0x30] sm:$0xf]
    %v285 = vld [vmem:[#allocation8 + $0x34] sm:$0xf]
    %v286 = vld [vmem:[#allocation8 + $0x38] sm:$0xf]
    %v287 = vld [vmem:[#allocation8 + $0x3c] sm:$0xf]
    %v288 = vperm.slane %v101, 0
    %v305 = vunpack.c.l.b16 %v272
    %v306 = vunpack.c.l.b16 %v273
    %v307 = vunpack.c.l.b16 %v274
    %v308 = vunpack.c.l.b16 %v275
    %v309 = vunpack.c.l.b16 %v276
    %v310 = vunpack.c.l.b16 %v277
    %v311 = vunpack.c.l.b16 %v278
    %v312 = vunpack.c.l.b16 %v279
    %v313 = vunpack.c.l.b16 %v280
    %v314 = vunpack.c.l.b16 %v281
    %v315 = vunpack.c.l.b16 %v282
    %v316 = vunpack.c.l.b16 %v283
    %v317 = vunpack.c.l.b16 %v284
    %v318 = vunpack.c.l.b16 %v285
    %v319 = vunpack.c.l.b16 %v286
    %v320 = vunpack.c.l.b16 %v287
    %v321 = vpack.c.b16 %v306, %v305
    %v322 = vpack.c.b16 %v308, %v307
    %v323 = vpack.c.b16 %v310, %v309
    %v324 = vpack.c.b16 %v312, %v311
    %v325 = vpack.c.b16 %v314, %v313
    %v326 = vpack.c.b16 %v316, %v315
    %v327 = vpack.c.b16 %v318, %v317
    %v328 = vpack.c.b16 %v320, %v319
    %337 = vmatpush.bf16.msra.mxu0 %v328
    %338 = vmatpush.bf16.msra.mxu0 %v327
    %339 = vmatpush.bf16.msra.mxu0 %v326
    %340 = vmatpush.bf16.msra.mxu0 %v325
    %341 = vmatpush.bf16.msra.mxu0 %v324
    %342 = vmatpush.bf16.msra.mxu0 %v323
    %343 = vmatpush.bf16.msra.mxu0 %v322
    %344 = vmatpush.bf16.msra.mxu0 %v321
    %345 = vmatmul.bf16.gmra.mxu0 %v271
    %v346 = vpop.f32.mrf.mxu0
    %v347 = vadd.f32 %v288, %v346
    %v348 = vpop.f32.mrf.mxu0
    %v349 = vadd.f32 %v288, %v348
    %350 = vdwg.mxu0
    %v351 = vtanh.pop %v347
    %v352 = vtanh.pop %v349
    %353 = vst [vmem:[#allocation11] sm:$0xff] %v351
    %354 = vst [vmem:[#allocation11 + $0x8] sm:$0xff] %v352
    // Predicated region
    $region42: #{tpu_custom_call.1} parent=1 // pred_check
      _
    $region43: #{tpu_custom_call.1} parent=1 // pred_check_branch
      %356 = sbr.rel (0) target = $region45
    $region44: #{tpu_custom_call.1} parent=1 // pred_region
      %358 = vsyncadd [#allocation4], 0
      %s359 = sshll.u32 [#allocation11], 4
      %s360 = int_to_ptr.vmem [resolvable:$true] %s359
      %s361 = sshll.u32 %s5, 4
      %s362 = int_to_ptr.hbm [resolvable:$true] %s361
      %367 = dma.vmem_to_hbm [thread:$0]  %s360, 256, %s362, [#allocation4], 128, 128, 8
    $region45: #{tpu_custom_call.1} parent=1 // pred_fallthru
      _
    // Predicated region
    $region46: #{tpu_custom_call.1} parent=1 // pred_check
      _
    $region47: #{tpu_custom_call.1} parent=1 // pred_check_branch
      %369 = sbr.rel (0) target = $region49
    $region48: #{tpu_custom_call.1} parent=1 // pred_region
      %371 = dma.done [#allocation4], 256
    $region49: #{tpu_custom_call.1} parent=1 // pred_fallthru
      _
    %372 = vsyncpa [#allocation3], 1
    %373 = vsyncpa [#allocation6], 1
    %374 = vsyncpa [#allocation9], 1
    %375 = vsyncpa [#allocation4], 1

</llo_original>
